<compile_context>
chip_gen: v7x
topology: tpu7x:2x2x1
jax: 0.10.0
libtpu: 0.0.40
codegen_flags: <defaults>
</compile_context>

<pallas_src>
import functools
import math

import jax
import jax.numpy as jnp
from jax.experimental import pallas as pl
from jax.experimental.pallas import tpu as pltpu


# --------------------------------------------------------------------------
# Kernel bodies
# --------------------------------------------------------------------------
def _attn_compute(q, k, v, o_ref, *, scale, scale_in, l2_attention,
                  mask_self, mask_value):
    """Core attention on in-register q/k/v values of shape (B_blk, T, C)."""
    f32 = jnp.float32
    in_dtype = q.dtype
    T = q.shape[1]

    if l2_attention:
        # Effective scale on q,k (applied pre-distance only when scale_in).
        s2 = (scale * scale) if scale_in else 1.0
        # Fold the (2 * s2) factor into the MXU lhs operand in the native
        # dtype: a T*C multiply instead of a T*T multiply, no f32 round-trip.
        q_mm = q * (2.0 * s2)
        # einsum contracts the channel axis directly -> no k.T relayout.
        qk2 = jnp.einsum('bqc,bkc->bqk', q_mm, k,
                         preferred_element_type=f32)          # = 2*s2*(q.k)

        qf = q.astype(f32)
        kf = k.astype(f32)
        qq = s2 * jnp.sum(qf * qf, axis=-1, keepdims=True)    # [B, T, 1]
        kk = s2 * jnp.sum(kf * kf, axis=-1)[:, None, :]       # [B, 1, T]

        d2 = qq + kk - qk2
        logits = -jnp.sqrt(jnp.maximum(d2, 0.0))               # [B, T, T] f32

        if mask_self:
            rows = jax.lax.broadcasted_iota(jnp.int32, (T, T), 0)
            cols = jax.lax.broadcasted_iota(jnp.int32, (T, T), 1)
            diag = (rows == cols)[None, :, :]                  # (1, T, T) bool
            logits = jnp.where(diag, mask_value, logits)
        if not scale_in:
            logits = logits * scale
    else:
        # Dot-product attention: fold the scalar into the lhs operand
        # (native dtype, no cast passes).
        coef = (scale * scale) if scale_in else scale
        q_mm = q * coef
        logits = jnp.einsum('bqc,bkc->bqk', q_mm, k,
                            preferred_element_type=f32)

    # Numerically stable softmax with deferred normalization:
    # divide the [B, T, C] PV result instead of the [B, T, T] probabilities.
    m = jnp.max(logits, axis=-1, keepdims=True)
    p = jnp.exp(logits - m)
    denom = jnp.sum(p, axis=-1, keepdims=True)                  # [B, T, 1]

    out = jnp.einsum('bqk,bkc->bqc', p.astype(in_dtype), v,
                     preferred_element_type=f32)                # [B, T, C]
    out = out * pl.reciprocal(denom, approx=True)               # EUP divide
    o_ref[...] = out.astype(o_ref.dtype)


def _qkv_attn_kernel_fused(qkv_ref, o_ref, *, C, **kw):
    """Single fused qkv block; q/k/v sliced in-register (C % 128 != 0 path)."""
    x = qkv_ref[...]                       # (B_blk, T, 3C), native dtype
    q = x[:, :, 0 * C:1 * C]
    k = x[:, :, 1 * C:2 * C]
    v = x[:, :, 2 * C:3 * C]
    _attn_compute(q, k, v, o_ref, **kw)


def _qkv_attn_kernel_split(q_ref, k_ref, v_ref, o_ref, **kw):
    """q/k/v delivered as separate lane-aligned DMA tiles (C % 128 == 0)."""
    _attn_compute(q_ref[...], k_ref[...], v_ref[...], o_ref, **kw)


# --------------------------------------------------------------------------
# Planning (generation-aware VMEM budget, batch-block size)
# --------------------------------------------------------------------------
def _vmem_capacity_bytes():
    try:
        info = pltpu.get_tpu_info()
        cap = getattr(info, "vmem_capacity_bytes", None)
        if cap is not None:
            return int(cap)
    except Exception:
        pass
    return 64 * 1024 * 1024   # conservative fallback (v7x per-core VMEM)


def _plan_blocks(N, T, C, itemsize, mask_self):
    """Pick (vmem_limit_bytes, B_blk) from the chip's VMEM capacity."""
    def pad_lane(x):
        return -(-x // 128) * 128

    def pad_sub(x):
        return -(-x // 8) * 8

    f32 = 4
    Tp, Tl = pad_sub(T), pad_lane(T)
    Cl, C3l = pad_lane(C), pad_lane(3 * C)

    # Double-buffered pipeline I/O per batch element (qkv in + out block).
    io = 2 * (Tp * C3l + Tp * Cl) * itemsize
    # In-kernel live temporaries per batch element (lane/sublane padded):
    qkv_vals = 3 * Tp * Cl * itemsize            # q, k, v values
    scaled = Tp * Cl * itemsize                  # q_mm
    f32_qc = 3 * Tp * Cl * f32                   # qf, kf, f32 PV accumulator
    tt = 2 * Tp * Tl * f32 + Tp * Tl * itemsize  # logits/d2, p, p cast
    stats = 4 * Tp * 128 * f32                   # qq, m, denom, recip rows
    per_b = io + qkv_vals + scaled + f32_qc + tt + stats

    fixed = (Tp * Tl * f32) if mask_self else 0  # (T, T) diag mask, built once
    fixed += 2 * 1024 * 1024                     # compiler-internal headroom

    cap = _vmem_capacity_bytes()
    # ~96 MiB on v5e/v6e (128 MiB VMEM), ~48 MiB on v7x (64 MiB VMEM).
    vmem_limit = min(int(cap * 0.75), 100 * 1024 * 1024)
    budget = int(vmem_limit * 0.85)

    max_b = max(1, (budget - fixed) // max(per_b, 1))
    # Keep at least 2 grid steps so the parallel batch axis can shard across
    # both TensorCores on v7x (and the pipeline keeps prefetch/writeback
    # overlapped).  Harmless on single-TC v5e/v6e.
    if N >= 2:
        max_b = min(max_b, pl.cdiv(N, 2))
    return int(vmem_limit), int(max(1, min(max_b, N)))


# --------------------------------------------------------------------------
# Wrapper
# --------------------------------------------------------------------------
def _qkv_index_map(slot):
    return lambda b: (b, 0, slot)


def qkv_attention(qkv, *, n_heads=1, scale=1.0, l2_attention=True,
                  scale_in=True, mask_self=False, mask_value=float("-inf"),
                  out_dtype=None):
    """Pallas implementation of QKVAttention.forward.

    qkv: [N, T, 3*C]  ->  returns [N, T, C]
    (n_heads is unused by the reference forward pass; kept for signature parity.)
    """
    del n_heads
    N, T, C3 = qkv.shape
    assert C3 % 3 == 0
    C = C3 // 3
    out_dtype = qkv.dtype if out_dtype is None else jnp.dtype(out_dtype)

    vmem_limit, B_blk = _plan_blocks(N, T, C, qkv.dtype.itemsize, mask_self)
    grid = (pl.cdiv(N, B_blk),)   # ragged last block is masked by Pallas

    common = dict(scale=float(scale), scale_in=bool(scale_in),
                  l2_attention=bool(l2_attention), mask_self=bool(mask_self),
                  mask_value=float(mask_value))

    if C % 128 == 0:
        # Lane-aligned q/k/v tiles delivered directly by the DMA engine
        # (index_map offsets the last *block* index: q->0, k->1, v->2).
        kernel = functools.partial(_qkv_attn_kernel_split, **common)
        in_specs = [pl.BlockSpec((B_blk, T, C), _qkv_index_map(s))
                    for s in range(3)]
        operands = (qkv, qkv, qkv)
    else:
        # C below lane width: keep the fused qkv block and slice in-register.
        kernel = functools.partial(_qkv_attn_kernel_fused, C=C, **common)
        in_specs = [pl.BlockSpec((B_blk, T, 3 * C), lambda b: (b, 0, 0))]
        operands = (qkv,)

    out_spec = pl.BlockSpec((B_blk, T, C), lambda b: (b, 0, 0))

    return pl.pallas_call(
        kernel,
        out_shape=jax.ShapeDtypeStruct((N, T, C), out_dtype),
        grid_spec=pltpu.PrefetchScalarGridSpec(
            num_scalar_prefetch=0,
            grid=grid,
            in_specs=in_specs,
            out_specs=out_spec,
        ),
        compiler_params=pltpu.CompilerParams(
            dimension_semantics=("parallel",),
            vmem_limit_bytes=vmem_limit,
        ),
    )(*operands)


# --------------------------------------------------------------------------
# Pure-JAX reference + self-test
# --------------------------------------------------------------------------
def _reference(qkv, *, scale, l2_attention, scale_in, mask_self, mask_value):
    N, T, C3 = qkv.shape
    C = C3 // 3
    q, k, v = qkv[:, :, :C], qkv[:, :, C:2 * C], qkv[:, :, 2 * C:]
    q = q.astype(jnp.float32)
    k = k.astype(jnp.float32)
    v = v.astype(jnp.float32)
    if scale_in:
        q = q * scale
        k = k * scale
    if l2_attention:
        d2 = (jnp.sum(q * q, -1)[:, :, None] + jnp.sum(k * k, -1)[:, None, :]
              - 2.0 * jnp.einsum("btc,bsc->bts", q, k))
        logits = -jnp.sqrt(jnp.maximum(d2, 0.0))
        if mask_self:
            eye = jnp.eye(T, dtype=bool)
            logits = jnp.where(eye[None], mask_value, logits)
    else:
        logits = jnp.einsum("btc,bsc->bts", q, k)
    if not scale_in:
        logits = logits * scale
    attn = jax.nn.softmax(logits, axis=-1)
    return jnp.einsum("bts,bsc->btc", attn, v)


if __name__ == "__main__":
    # small shapes consistent with the module: N=2, T=H*W=8*8=64, C=32
    N, H, W, C = 2, 8, 8, 32
    T = H * W
    key = jax.random.PRNGKey(0)
    qkv = jax.random.normal(key, (N, T, 3 * C), dtype=jnp.float32)

    scale = 1.0 / math.sqrt(math.sqrt(C))  # deterministic scale choice

    configs = [
        dict(l2_attention=True, scale_in=True, mask_self=False),
        dict(l2_attention=True, scale_in=False, mask_self=True),
        dict(l2_attention=False, scale_in=True, mask_self=False),
        dict(l2_attention=False, scale_in=False, mask_self=False),
    ]
    for cfg in configs:
        out = qkv_attention(qkv, n_heads=4, scale=scale,
                            mask_value=float("-inf"), **cfg)
        out = jax.block_until_ready(out)
        ref = _reference(qkv, scale=scale, mask_value=float("-inf"), **cfg)
        assert out.shape == (N, T, C)
        # tolerance covers the EUP approx-reciprocal used for the softmax denom
        err = float(jnp.max(jnp.abs(out - ref)))
        assert jnp.allclose(out, ref, atol=2e-3, rtol=2e-3), (cfg, err)

    print("KERNEL_OK")
</pallas_src>

<mosaic_0001>
module attributes {stable_mosaic.version = 11 : i64} {
  func.func @_qkv_attn_kernel_fused(%arg0: i32, %arg1: memref<1x64x96xf32, #tpu.memory_space<vmem>>, %arg2: memref<1x64x32xf32, #tpu.memory_space<vmem>>) attributes {dimension_semantics = [#tpu.dimension_semantics<parallel>], iteration_bounds = array<i64: 2>, scalar_prefetch = 0 : i64, scratch_operands = 0 : i64, tpu.core_type = #tpu.core_type<tc>, window_params = [{transform_indices = @transform_0, window_bounds = array<i64: 1, 64, 96>}, {transform_indices = @transform_1, window_bounds = array<i64: 1, 64, 32>}]} {
    %c0 = arith.constant 0 : index
    %c0_0 = arith.constant 0 : index
    %c0_1 = arith.constant 0 : index
    %0 = vector.load %arg1[%c0, %c0_0, %c0_1] : memref<1x64x96xf32, #tpu.memory_space<vmem>>, vector<1x64x96xf32>
    %1 = vector.extract_strided_slice %0 {offsets = [0, 0, 0], sizes = [1, 64, 32], strides = [1, 1, 1]} : vector<1x64x96xf32> to vector<1x64x32xf32>
    %2 = vector.extract_strided_slice %0 {offsets = [0, 0, 32], sizes = [1, 64, 32], strides = [1, 1, 1]} : vector<1x64x96xf32> to vector<1x64x32xf32>
    %3 = vector.extract_strided_slice %0 {offsets = [0, 0, 64], sizes = [1, 64, 32], strides = [1, 1, 1]} : vector<1x64x96xf32> to vector<1x64x32xf32>
    %cst = arith.constant 0.353553385 : f32
    %4 = vector.broadcast %cst : f32 to vector<1x64x32xf32>
    %5 = arith.mulf %1, %4 : vector<1x64x32xf32>
    "tpu.trace_start"() <{level = 10 : i32, message = "bqc,bkc->bqk"}> : () -> ()
    %cst_2 = arith.constant dense<0.000000e+00> : vector<1x64x64xf32>
    %6 = tpu.matmul %5, %2, %cst_2 {dimension_numbers = #tpu.dot_dimension_numbers<[2], [2], [1], [1], [0, 0, 0, 1, 1, 1], [0], [0]>} : vector<1x64x32xf32>, vector<1x64x32xf32>, vector<1x64x64xf32> -> vector<1x64x64xf32>
    "tpu.trace_stop"() : () -> ()
    %7 = arith.mulf %1, %1 : vector<1x64x32xf32>
    %cst_3 = arith.constant dense<0.000000e+00> : vector<1x64xf32>
    %8 = vector.multi_reduction <add>, %7, %cst_3 [2] : vector<1x64x32xf32> to vector<1x64xf32>
    %9 = vector.shape_cast %8 : vector<1x64xf32> to vector<1x64x1xf32>
    %cst_4 = arith.constant 0.176776692 : f32
    %10 = vector.broadcast %cst_4 : f32 to vector<1x64x1xf32>
    %11 = arith.mulf %10, %9 : vector<1x64x1xf32>
    %12 = arith.mulf %2, %2 : vector<1x64x32xf32>
    %cst_5 = arith.constant dense<0.000000e+00> : vector<1x64xf32>
    %13 = vector.multi_reduction <add>, %12, %cst_5 [2] : vector<1x64x32xf32> to vector<1x64xf32>
    %14 = vector.shape_cast %13 : vector<1x64xf32> to vector<1x1x64xf32>
    %cst_6 = arith.constant 0.176776692 : f32
    %15 = vector.broadcast %cst_6 : f32 to vector<1x1x64xf32>
    %16 = arith.mulf %15, %14 : vector<1x1x64xf32>
    %17 = vector.broadcast %11 : vector<1x64x1xf32> to vector<1x64x64xf32>
    %18 = vector.broadcast %16 : vector<1x1x64xf32> to vector<1x64x64xf32>
    %19 = arith.addf %17, %18 : vector<1x64x64xf32>
    %20 = arith.subf %19, %6 : vector<1x64x64xf32>
    %cst_7 = arith.constant 0.000000e+00 : f32
    %21 = vector.broadcast %cst_7 : f32 to vector<1x64x64xf32>
    %22 = arith.maximumf %20, %21 : vector<1x64x64xf32>
    %23 = math.sqrt %22 : vector<1x64x64xf32>
    %cst_8 = arith.constant 0.000000e+00 : f32
    %24 = vector.broadcast %cst_8 : f32 to vector<1x64x64xf32>
    %25 = arith.subf %24, %23 : vector<1x64x64xf32>
    %cst_9 = arith.constant dense<0xFF800000> : vector<1x64xf32>
    %26 = vector.multi_reduction <maximumf>, %25, %cst_9 [2] : vector<1x64x64xf32> to vector<1x64xf32>
    %27 = vector.shape_cast %26 : vector<1x64xf32> to vector<1x64x1xf32>
    %28 = vector.broadcast %27 : vector<1x64x1xf32> to vector<1x64x64xf32>
    %29 = arith.subf %25, %28 : vector<1x64x64xf32>
    %30 = math.exp %29 : vector<1x64x64xf32>
    %cst_10 = arith.constant dense<0.000000e+00> : vector<1x64xf32>
    %31 = vector.multi_reduction <add>, %30, %cst_10 [2] : vector<1x64x64xf32> to vector<1x64xf32>
    %32 = vector.shape_cast %31 : vector<1x64xf32> to vector<1x64x1xf32>
    "tpu.trace_start"() <{level = 10 : i32, message = "bqk,bkc->bqc"}> : () -> ()
    %cst_11 = arith.constant dense<0.000000e+00> : vector<1x64x32xf32>
    %33 = tpu.matmul %30, %3, %cst_11 {dimension_numbers = #tpu.dot_dimension_numbers<[2], [1], [1], [2], [0, 0, 0, 1, 1, 2], [0], [0]>} : vector<1x64x64xf32>, vector<1x64x32xf32>, vector<1x64x32xf32> -> vector<1x64x32xf32>
    "tpu.trace_stop"() : () -> ()
    %34 = tpu.reciprocal %32 {approx = true} : vector<1x64x1xf32> -> vector<1x64x1xf32>
    %35 = vector.broadcast %34 : vector<1x64x1xf32> to vector<1x64x32xf32>
    %36 = arith.mulf %33, %35 : vector<1x64x32xf32>
    %c0_12 = arith.constant 0 : index
    %c0_13 = arith.constant 0 : index
    %c0_14 = arith.constant 0 : index
    %37 = vector.load %arg2[%c0_12, %c0_13, %c0_14] : memref<1x64x32xf32, #tpu.memory_space<vmem>>, vector<1x64x32xf32>
    tpu.vector_store %arg2[%c0_12, %c0_13, %c0_14], %36 {strides = array<i32>} : memref<1x64x32xf32, #tpu.memory_space<vmem>>, vector<1x64x32xf32>,
    return
  }
  func.func @transform_0(%arg0: i32) -> (i32, i32, i32) {
    %c0_i32 = arith.constant 0 : i32
    %c0_i32_0 = arith.constant 0 : i32
    %c0_i32_1 = arith.constant 0 : i32
    return %arg0, %c0_i32, %c0_i32_0 : i32, i32, i32
  }
  func.func @transform_1(%arg0: i32) -> (i32, i32, i32) {
    %c0_i32 = arith.constant 0 : i32
    %c0_i32_0 = arith.constant 0 : i32
    %c0_i32_1 = arith.constant 0 : i32
    return %arg0, %c0_i32, %c0_i32_0 : i32, i32, i32
  }
}

</mosaic_0001>

<llo_original>
// kernel: tpu_custom_call.1
$region0: #{tpu_custom_call.1}
  #allocation0 [shape = 'u32[]', space=smem, size = 0x4, offset = 0x4, fixed_abs, tag = 'smem constant byte address 0x4 - core index']
  #allocation1 [shape = 'u32[144,128]{1,0:T(1,128)}', space=vmem, size = 0x12000, scoped, tag = 'internal scratch']
  %s0 = inlined_call_operand.hbm [shape: f32[2,64,96], index: 0, kind: input, shape index: {}]
  %s1 = inlined_call_operand.vmem [shape: f32[2,64,32], index: 1, kind: output, shape index: {}]
  %s2 = sld [smem:[#allocation0]]
  $region41: #{tpu_custom_call.1} parent=0
    _
  %s4 = ssub.s32 1, %s2
  %s5 = scalar_select 0, %s4, %s2
  $region1: #{tpu_custom_call.1} parent=0
    #allocation2 [shape = 'u8[65536]{0}', space=vmem, size = 0x10000, scoped, tag = 'input window, operand 0']
    #allocation3 [shape = 's32[2]{0}', space=sflag, size = 0x8, scoped, tag = 'scoped memory for tpu_custom_call.1']
    %6 = vsyncpa [#allocation3], 0
    %s7 = scalar_lea.sflag [#allocation3], 1
    %8 = vsyncpa %s7, 0
    loop: start=0, step=1, limit=4
    $region2: #{tpu_custom_call.1} parent=1 // loop_pre_header
      _
    $region3: #{tpu_custom_call.1} parent=1 // loop_header
      %s10 = sphi 0, %s14
      %p11 = scmp.ge.s32.totalorder %s10, 4
      %s20 = sphi 0, %s22
      %s23 = sphi 0, %s20
      %s24 = sphi 0, %s23
      %s40 = sphi 0, %s24
      %s46 = sphi 0, %s48
      %s49 = sphi 0, %s46
      %s50 = sphi 0, %s49
      %s66 = sphi 0, %s50
    $region4: #{tpu_custom_call.1} parent=1 // loop_header_branch
      %13 = sbr.rel (%p11) target = $region8
    $region5: #{tpu_custom_call.1} parent=1 // loop_body
      %s15 = ssub.s32 %s10, 1
      %s16 = ssub.s32 %s10, 2
      %s17 = sadd.s32 %s10, 1
      %s18 = ssub.s32 %s10, %s17
      %p19 = scmp.eq.s32.totalorder %s18, 0
      %s21 = sadd.s32 %s20, 1
      %s22 = scalar_select %p19, %s20, %s21
      %p25 = pneg %p19
      %p26 = scmp.eq.s32.totalorder %s10, 1
      %p27 = por %p25, %p26
      %p28 = scmp.ne.s32.totalorder %s20, %s23
      %p29 = scmp.eq.s32.totalorder %s10, 0
      %p30 = por %p28, %p29
      %p31 = scmp.ne.s32.totalorder %s20, %s23
      %p32 = scmp.eq.s32.totalorder %s15, 1
      %p33 = por %p31, %p32
      %p34 = scmp.ne.s32.totalorder %s23, %s24
      %p35 = scmp.eq.s32.totalorder %s15, 0
      %p36 = por %p34, %p35
      %p37 = scmp.ne.s32.totalorder %s23, %s24
      %p38 = scmp.eq.s32.totalorder %s16, 1
      %p39 = por %p37, %p38
      %p41 = scmp.ne.s32.totalorder %s24, %s40
      %p42 = scmp.eq.s32.totalorder %s16, 0
      %p43 = por %p41, %p42
      %s44 = ssub.s32 %s10, %s17
      %p45 = scmp.eq.s32.totalorder %s44, 0
      %s47 = sadd.s32 %s46, 1
      %s48 = scalar_select %p45, %s46, %s47
      %p51 = pneg %p45
      %p52 = scmp.eq.s32.totalorder %s10, 1
      %p53 = por %p51, %p52
      %p54 = scmp.ne.s32.totalorder %s46, %s49
      %p55 = scmp.eq.s32.totalorder %s10, 0
      %p56 = por %p54, %p55
      %p57 = scmp.ne.s32.totalorder %s46, %s49
      %p58 = scmp.eq.s32.totalorder %s15, 1
      %p59 = por %p57, %p58
      %p60 = scmp.ne.s32.totalorder %s49, %s50
      %p61 = scmp.eq.s32.totalorder %s15, 0
      %p62 = por %p60, %p61
      %p63 = scmp.ne.s32.totalorder %s49, %s50
      %p64 = scmp.eq.s32.totalorder %s16, 1
      %p65 = por %p63, %p64
      %p67 = scmp.ne.s32.totalorder %s50, %s66
      %p68 = scmp.eq.s32.totalorder %s16, 0
      %p69 = por %p67, %p68
      %p70 = scmp.le.s32.totalorder 1, %s10
      %p71 = scmp.lt.s32.totalorder %s10, 3
      %p72 = pnand %p70, %p71
      %p73 = pneg %p72
      // Predicated region
      $region9: #{tpu_custom_call.1} parent=5 // pred_check
        _
      $region10: #{tpu_custom_call.1} parent=5 // pred_check_branch
        %75 = sbr.rel (%p72) target = $region12
      $region11: #{tpu_custom_call.1} parent=5 // pred_region
        %s76 = ssub.s32 %s10, 1
      $region12: #{tpu_custom_call.1} parent=5 // pred_fallthru
        _
      %p77 = scmp.lt.s32.totalorder %s10, 2
      // Predicated region
      $region13: #{tpu_custom_call.1} parent=5 // pred_check
        %p78 = pneg %p77
      $region14: #{tpu_custom_call.1} parent=5 // pred_check_branch
        %80 = sbr.rel (%p78) target = $region16
      $region15: #{tpu_custom_call.1} parent=5 // pred_region
        // Predicated region
        $region17: #{tpu_custom_call.1} parent=15 // pred_check
          %p81 = pneg %p30
        $region18: #{tpu_custom_call.1} parent=15 // pred_check_branch
          %83 = sbr.rel (%p81) target = $region20
        $region19: #{tpu_custom_call.1} parent=15 // pred_region
          %s84 = sand.u32 %s20, 1
          %s85 = scalar_lea.sflag [#allocation3], %s84
          %s86 = sand.u32 %s20, 1
          %s87 = smul.addr %s86, 64
          %s88 = scalar_lea.vmem [#allocation2], %s87
          %s90 = ssub.s32 1024, 1024
          %91 = vsyncadd %s85, %s90
          %s92 = smul.addr %s10, 8
          %s93 = smul.addr %s92, 128
          %s94 = scalar_lea.hbm %s0, %s93
          %s95 = sshll.u32 %s88, 4
          %s96 = int_to_ptr.vmem [resolvable:$true] %s95
          %101 = dma.hbm_to_vmem [thread:$0]  %s94, 1024, %s96, %s85, 128, 128, 8
        $region20: #{tpu_custom_call.1} parent=15 // pred_fallthru
          _
      $region16: #{tpu_custom_call.1} parent=5 // pred_fallthru
        _
      %p102 = scmp.le.s32.totalorder 1, %s10
      %p103 = scmp.lt.s32.totalorder %s10, 3
      %p104 = pnand %p102, %p103
      %p105 = pneg %p104
      // Predicated region
      $region21: #{tpu_custom_call.1} parent=5 // pred_check
        _
      $region22: #{tpu_custom_call.1} parent=5 // pred_check_branch
        %107 = sbr.rel (%p104) target = $region24
      $region23: #{tpu_custom_call.1} parent=5 // pred_region
        %s108 = ssub.s32 %s10, 1
        %s109 = sand.u32 %s23, 1
        %s110 = scalar_lea.sflag [#allocation3], %s109
        %s111 = sand.u32 %s23, 1
        %s112 = smul.addr %s111, 64
        %s113 = scalar_lea.vmem [#allocation2], %s112
        // Predicated region
        $region25: #{tpu_custom_call.1} parent=23 // pred_check
          %p114 = pneg %p36
        $region26: #{tpu_custom_call.1} parent=23 // pred_check_branch
          %116 = sbr.rel (%p114) target = $region28
        $region27: #{tpu_custom_call.1} parent=23 // pred_region
          %117 = dma.done %s110, 1024
        $region28: #{tpu_custom_call.1} parent=23 // pred_fallthru
          _
        %s118 = sand.u32 %s23, 1
        %s119 = scalar_lea.sflag [#allocation3], %s118
        %s120 = sand.u32 %s23, 1
        %s121 = smul.addr %s120, 64
        %s122 = scalar_lea.vmem [#allocation2], %s121
        %p123 = pneg %p36
        %p124 = pneg %p33
        %p125 = pneg %p62
        %p126 = pneg %p59
        %p127 = scmp.lt.s32.totalorder %s15, 1
        %s128 = scalar_select %p127, %s15, 1
        %s129 = smul.addr %s128, 8
        %s130 = smul.addr %s129, 8
        %s131 = scalar_lea.vmem %s1, %s130
        %p132 = scmp.lt.s32.totalorder %s15, 1
        %s133 = scalar_select %p132, %s15, 1
        %s134 = smul.addr %s133, 8
        %s135 = smul.addr %s134, 8
        %s136 = scalar_lea.vmem %s1, %s135
        %v137 = vld [vmem:[%s113] sm:$0xff]
        %v138 = vld [vmem:[%s113 + $0x8] sm:$0xff]
        %v139 = vld [vmem:[%s113 + $0x10] sm:$0xff]
        %v140 = vld [vmem:[%s113 + $0x18] sm:$0xff]
        %v141 = vld [vmem:[%s113 + $0x20] sm:$0xff]
        %v142 = vld [vmem:[%s113 + $0x28] sm:$0xff]
        %v143 = vld [vmem:[%s113 + $0x30] sm:$0xff]
        %v144 = vld [vmem:[%s113 + $0x38] sm:$0xff]
        %v145 = vmul.f32 %v137, 0.35355338
        %v146 = vmul.f32 %v138, 0.35355338
        %v147 = vmul.f32 %v139, 0.35355338
        %v148 = vmul.f32 %v140, 0.35355338
        %v149 = vmul.f32 %v141, 0.35355338
        %v150 = vmul.f32 %v142, 0.35355338
        %v151 = vmul.f32 %v143, 0.35355338
        %v152 = vmul.f32 %v144, 0.35355338
        %161 = vrot.lane.b32.xlu0 %v137, 96
        %v162 = vpop.permute.xlu0 %161
        %163 = vrot.lane.b32.xlu0 %v138, 96
        %v164 = vpop.permute.xlu0 %163
        %165 = vrot.lane.b32.xlu0 %v139, 96
        %v166 = vpop.permute.xlu0 %165
        %167 = vrot.lane.b32.xlu0 %v140, 96
        %v168 = vpop.permute.xlu0 %167
        %169 = vrot.lane.b32.xlu0 %v141, 96
        %v170 = vpop.permute.xlu0 %169
        %171 = vrot.lane.b32.xlu0 %v142, 96
        %v172 = vpop.permute.xlu0 %171
        %173 = vrot.lane.b32.xlu0 %v143, 96
        %v174 = vpop.permute.xlu0 %173
        %175 = vrot.lane.b32.xlu0 %v144, 96
        %v176 = vpop.permute.xlu0 %175
        %vm177 = vcmask 261120
        %v179 = vsel %vm177, %v145, 0
        %v182 = vsel %vm177, %v146, 0
        %v185 = vsel %vm177, %v147, 0
        %v188 = vsel %vm177, %v148, 0
        %v191 = vsel %vm177, %v149, 0
        %v194 = vsel %vm177, %v150, 0
        %v197 = vsel %vm177, %v151, 0
        %v200 = vsel %vm177, %v152, 0
        %v202 = vsel %vm177, %v162, 0
        %v204 = vsel %vm177, %v164, 0
        %v206 = vsel %vm177, %v166, 0
        %v208 = vsel %vm177, %v168, 0
        %v210 = vsel %vm177, %v170, 0
        %v212 = vsel %vm177, %v172, 0
        %v214 = vsel %vm177, %v174, 0
        %v216 = vsel %vm177, %v176, 0
        %218 = vmatprep.subr.mxu0 0.0
        %219 = vmatpush1.xpose.msra.mxu0 %v202
        %220 = vmatprep.subr.mxu0 0.0
        %221 = vmatpush1.xpose.msra.mxu0 %v204
        %222 = vmatprep.subr.mxu0 0.0
        %223 = vmatpush1.xpose.msra.mxu0 %v206
        %224 = vmatprep.subr.mxu0 0.0
        %225 = vmatpush1.xpose.msra.mxu0 %v208
        %226 = vmatprep.subr.mxu0 0.0
        %227 = vmatpush1.xpose.msra.mxu0 %v210
        %228 = vmatprep.subr.mxu0 0.0
        %229 = vmatpush1.xpose.msra.mxu0 %v212
        %230 = vmatprep.subr.mxu0 0.0
        %231 = vmatpush1.xpose.msra.mxu0 %v214
        %232 = vmatprep.subr.mxu0 0.0
        %233 = vmatpush1.xpose.msra.mxu0 %v216
        %234 = vmatprep.subr.mxu0 0.0
        %235 = vmatpush1.xpose.msra.mxu0 0.0
        %236 = vmatprep.subr.mxu0 0.0
        %237 = vmatpush1.xpose.msra.mxu0 0.0
        %238 = vmatprep.subr.mxu0 0.0
        %239 = vmatpush1.xpose.msra.mxu0 0.0
        %240 = vmatprep.subr.mxu0 0.0
        %241 = vmatpush1.xpose.msra.mxu0 0.0
        %242 = vmatprep.subr.mxu0 0.0
        %243 = vmatpush1.xpose.msra.mxu0 0.0
        %244 = vmatprep.subr.mxu0 0.0
        %245 = vmatpush1.xpose.msra.mxu0 0.0
        %246 = vmatprep.subr.mxu0 0.0
        %247 = vmatpush1.xpose.msra.mxu0 0.0
        %248 = vmatprep.subr.mxu0 0.0
        %249 = vmatpush1.xpose.msra.mxu0 0.0
        %250 = vmatprep.subr.mxu0 0.0
        %251 = vmatpush1.xpose.msra.mxu0 0.0
        %252 = vmatprep.subr.mxu0 0.0
        %253 = vmatpush1.xpose.msra.mxu0 0.0
        %254 = vmatprep.subr.mxu0 0.0
        %255 = vmatpush1.xpose.msra.mxu0 0.0
        %256 = vmatprep.subr.mxu0 0.0
        %257 = vmatpush1.xpose.msra.mxu0 0.0
        %258 = vmatprep.subr.mxu0 0.0
        %259 = vmatpush1.xpose.msra.mxu0 0.0
        %260 = vmatprep.subr.mxu0 0.0
        %261 = vmatpush1.xpose.msra.mxu0 0.0
        %262 = vmatprep.subr.mxu0 0.0
        %263 = vmatpush1.xpose.msra.mxu0 0.0
        %264 = vmatprep.subr.mxu0 0.0
        %265 = vmatpush1.xpose.msra.mxu0 0.0
        %266 = vmatprep.subr.mxu0 0.0
        %267 = vmatpush1.xpose.msra.mxu0 0.0
        %268 = vmatprep.subr.mxu0 0.0
        %269 = vmatpush1.xpose.msra.mxu0 0.0
        %270 = vmatprep.subr.mxu0 0.0
        %271 = vmatpush1.xpose.msra.mxu0 0.0
        %272 = vmatprep.subr.mxu0 0.0
        %273 = vmatpush1.xpose.msra.mxu0 0.0
        %274 = vmatprep.subr.mxu0 0.0
        %275 = vmatpush1.xpose.msra.mxu0 0.0
        %276 = vmatprep.subr.mxu0 0.0
        %277 = vmatpush1.xpose.msra.mxu0 0.0
        %278 = vmatprep.subr.mxu0 0.0
        %279 = vmatpush1.xpose.msra.mxu0 0.0
        %280 = vmatprep.subr.mxu0 0.0
        %281 = vmatpush1.xpose.msra.mxu0 0.0
        %282 = vmatprep.mubr.f32.mxu0 0.0
        %283 = vmatmul.mubr.f32.gmra.mrb[0].mxu0 %v179
        %v284 = vpop.f32.mrb[0].mxu0
        %v285 = vadd.f32 0.0, %v284
        %v286 = vpop.f32.mrb[0].mxu0
        %287 = vmatprep.mubr.f32.mxu0 0.0
        %288 = vmatmul.mubr.f32.gmra.mrb[0].mxu0 %v182
        %v289 = vpop.f32.mrb[0].mxu0
        %v290 = vadd.f32 0.0, %v289
        %v291 = vpop.f32.mrb[0].mxu0
        %292 = vmatprep.mubr.f32.mxu0 0.0
        %293 = vmatmul.mubr.f32.gmra.mrb[0].mxu0 %v185
        %v294 = vpop.f32.mrb[0].mxu0
        %v295 = vadd.f32 0.0, %v294
        %v296 = vpop.f32.mrb[0].mxu0
        %297 = vmatprep.mubr.f32.mxu0 0.0
        %298 = vmatmul.mubr.f32.gmra.mrb[0].mxu0 %v188
        %v299 = vpop.f32.mrb[0].mxu0
        %v300 = vadd.f32 0.0, %v299
        %v301 = vpop.f32.mrb[0].mxu0
        %302 = vmatprep.mubr.f32.mxu0 0.0
        %303 = vmatmul.mubr.f32.gmra.mrb[0].mxu0 %v191
        %v304 = vpop.f32.mrb[0].mxu0
        %v305 = vadd.f32 0.0, %v304
        %v306 = vpop.f32.mrb[0].mxu0
        %307 = vmatprep.mubr.f32.mxu0 0.0
        %308 = vmatmul.mubr.f32.gmra.mrb[0].mxu0 %v194
        %v309 = vpop.f32.mrb[0].mxu0
        %v310 = vadd.f32 0.0, %v309
        %v311 = vpop.f32.mrb[0].mxu0
        %312 = vmatprep.mubr.f32.mxu0 0.0
        %313 = vmatmul.mubr.f32.gmra.mrb[0].mxu0 %v197
        %v314 = vpop.f32.mrb[0].mxu0
        %v315 = vadd.f32 0.0, %v314
        %v316 = vpop.f32.mrb[0].mxu0
        %317 = vmatprep.mubr.f32.mxu0 0.0
        %318 = vmatmul.mubr.f32.gmra.mrb[0].mxu0 %v200
        %v319 = vpop.f32.mrb[0].mxu0
        %v320 = vadd.f32 0.0, %v319
        %v321 = vpop.f32.mrb[0].mxu0
        %322 = vdwg.mxu0
        %v323 = vmul.f32 %v137, %v137
        %v324 = vmul.f32 %v138, %v138
        %v325 = vmul.f32 %v139, %v139
        %v326 = vmul.f32 %v140, %v140
        %v327 = vmul.f32 %v141, %v141
        %v328 = vmul.f32 %v142, %v142
        %v329 = vmul.f32 %v143, %v143
        %v330 = vmul.f32 %v144, %v144
        %v331 = vsel %vm177, %v323, 0.0
        %332 = vadd.xlane.f32.xlu0 %v331
        %v333 = vpop.xlane.xlu0 %332
        %v334 = vsel %vm177, %v324, 0.0
        %335 = vadd.xlane.f32.xlu0 %v334
        %v336 = vpop.xlane.xlu0 %335
        %v337 = vsel %vm177, %v325, 0.0
        %338 = vadd.xlane.f32.xlu0 %v337
        %v339 = vpop.xlane.xlu0 %338
        %v340 = vsel %vm177, %v326, 0.0
        %341 = vadd.xlane.f32.xlu0 %v340
        %v342 = vpop.xlane.xlu0 %341
        %v343 = vsel %vm177, %v327, 0.0
        %344 = vadd.xlane.f32.xlu0 %v343
        %v345 = vpop.xlane.xlu0 %344
        %v346 = vsel %vm177, %v328, 0.0
        %347 = vadd.xlane.f32.xlu0 %v346
        %v348 = vpop.xlane.xlu0 %347
        %v349 = vsel %vm177, %v329, 0.0
        %350 = vadd.xlane.f32.xlu0 %v349
        %v351 = vpop.xlane.xlu0 %350
        %v352 = vsel %vm177, %v330, 0.0
        %353 = vadd.xlane.f32.xlu0 %v352
        %v354 = vpop.xlane.xlu0 %353
        %v355 = vmul.f32 %v333, 0.17677669
        %v356 = vmul.f32 %v336, 0.17677669
        %v357 = vmul.f32 %v339, 0.17677669
        %v358 = vmul.f32 %v342, 0.17677669
        %v359 = vmul.f32 %v345, 0.17677669
        %v360 = vmul.f32 %v348, 0.17677669
        %v361 = vmul.f32 %v351, 0.17677669
        %v362 = vmul.f32 %v354, 0.17677669
        %371 = vrot.lane.b32.xlu0 %v323, 96
        %v372 = vpop.permute.xlu0 %371
        %373 = vrot.lane.b32.xlu0 %v324, 96
        %v374 = vpop.permute.xlu0 %373
        %375 = vrot.lane.b32.xlu0 %v325, 96
        %v376 = vpop.permute.xlu0 %375
        %377 = vrot.lane.b32.xlu0 %v326, 96
        %v378 = vpop.permute.xlu0 %377
        %379 = vrot.lane.b32.xlu0 %v327, 96
        %v380 = vpop.permute.xlu0 %379
        %381 = vrot.lane.b32.xlu0 %v328, 96
        %v382 = vpop.permute.xlu0 %381
        %383 = vrot.lane.b32.xlu0 %v329, 96
        %v384 = vpop.permute.xlu0 %383
        %385 = vrot.lane.b32.xlu0 %v330, 96
        %v386 = vpop.permute.xlu0 %385
        %v395 = vsel %vm177, %v372, 0.0
        %396 = vadd.xlane.f32.xlu0 %v395
        %v397 = vpop.xlane.xlu0 %396
        %v398 = vsel %vm177, %v374, 0.0
        %399 = vadd.xlane.f32.xlu0 %v398
        %v400 = vpop.xlane.xlu0 %399
        %v401 = vsel %vm177, %v376, 0.0
        %402 = vadd.xlane.f32.xlu0 %v401
        %v403 = vpop.xlane.xlu0 %402
        %v404 = vsel %vm177, %v378, 0.0
        %405 = vadd.xlane.f32.xlu0 %v404
        %v406 = vpop.xlane.xlu0 %405
        %v407 = vsel %vm177, %v380, 0.0
        %408 = vadd.xlane.f32.xlu0 %v407
        %v409 = vpop.xlane.xlu0 %408
        %v410 = vsel %vm177, %v382, 0.0
        %411 = vadd.xlane.f32.xlu0 %v410
        %v412 = vpop.xlane.xlu0 %411
        %v413 = vsel %vm177, %v384, 0.0
        %414 = vadd.xlane.f32.xlu0 %v413
        %v415 = vpop.xlane.xlu0 %414
        %v416 = vsel %vm177, %v386, 0.0
        %417 = vadd.xlane.f32.xlu0 %v416
        %v418 = vpop.xlane.xlu0 %417
        %v419 = vmul.f32 %v397, 0.17677669
        %v420 = vmul.f32 %v400, 0.17677669
        %v421 = vmul.f32 %v403, 0.17677669
        %v422 = vmul.f32 %v406, 0.17677669
        %v423 = vmul.f32 %v409, 0.17677669
        %v424 = vmul.f32 %v412, 0.17677669
        %v425 = vmul.f32 %v415, 0.17677669
        %v426 = vmul.f32 %v418, 0.17677669
        %v435 = vlaneseq
        %v436 = vand.u32 %v435, 127
        %v437 = vlaneseq
        %v438 = vshrl.u32 %v437, 7
        %v439 = vsub.s32 %v436, %v438
        %v440 = vrot.slane %v419, %v439
        %v441 = vadd.s32 %v436, 4294967288
        %v442 = vlaneseq
        %v443 = vshrl.u32 %v442, 7
        %v444 = vsub.s32 %v441, %v443
        %v445 = vrot.slane %v420, %v444
        %vm446 = vcmask 130112
        %v447 = vsel %vm446, %v445, %v440
        %v448 = vadd.s32 %v436, 4294967280
        %v449 = vlaneseq
        %v450 = vshrl.u32 %v449, 7
        %v451 = vsub.s32 %v448, %v450
        %v452 = vrot.slane %v421, %v451
        %vm453 = vcmask 195712
        %v454 = vsel %vm453, %v452, %v447
        %v455 = vadd.s32 %v436, 4294967272
        %v456 = vlaneseq
        %v457 = vshrl.u32 %v456, 7
        %v458 = vsub.s32 %v455, %v457
        %v459 = vrot.slane %v422, %v458
        %vm460 = vcmask 261312
        %v461 = vsel %vm460, %v459, %v454
        %v462 = vadd.s32 %v436, 4294967264
        %v463 = vlaneseq
        %v464 = vshrl.u32 %v463, 7
        %v465 = vsub.s32 %v462, %v464
        %v466 = vrot.slane %v423, %v465
        %vm467 = vcmask 326912
        %v468 = vsel %vm467, %v466, %v461
        %v469 = vadd.s32 %v436, 4294967256
        %v470 = vlaneseq
        %v471 = vshrl.u32 %v470, 7
        %v472 = vsub.s32 %v469, %v471
        %v473 = vrot.slane %v424, %v472
        %vm474 = vcmask 392512
        %v475 = vsel %vm474, %v473, %v468
        %v476 = vadd.s32 %v436, 4294967248
        %v477 = vlaneseq
        %v478 = vshrl.u32 %v477, 7
        %v479 = vsub.s32 %v476, %v478
        %v480 = vrot.slane %v425, %v479
        %vm481 = vcmask 458112
        %v482 = vsel %vm481, %v480, %v475
        %v483 = vadd.s32 %v436, 4294967240
        %v484 = vlaneseq
        %v485 = vshrl.u32 %v484, 7
        %v486 = vsub.s32 %v483, %v485
        %v487 = vrot.slane %v426, %v486
        %vm488 = vcmask 523712
        %v489 = vsel %vm488, %v487, %v482
        %vm490 = vcmask 1042434
        %v491 = vsel %vm490, %v489, %v489
        %vm492 = vcmask 1043459
        %v493 = vsel %vm492, %v489, %v491
        %vm494 = vcmask 1044484
        %v495 = vsel %vm494, %v489, %v493
        %vm496 = vcmask 1045509
        %v497 = vsel %vm496, %v489, %v495
        %vm498 = vcmask 1046534
        %v499 = vsel %vm498, %v489, %v497
        %vm500 = vcmask 1047559
        %v501 = vsel %vm500, %v489, %v499
        %v503 = vadd.f32 %v355, %v501
        %v504 = vadd.f32 %v356, %v501
        %v505 = vadd.f32 %v357, %v501
        %v506 = vadd.f32 %v358, %v501
        %v507 = vadd.f32 %v359, %v501
        %v508 = vadd.f32 %v360, %v501
        %v509 = vadd.f32 %v361, %v501
        %v510 = vadd.f32 %v362, %v501
        %v511 = vsub.f32 %v503, %v285
        %v512 = vsub.f32 %v504, %v290
        %v513 = vsub.f32 %v505, %v295
        %v514 = vsub.f32 %v506, %v300
        %v515 = vsub.f32 %v507, %v305
        %v516 = vsub.f32 %v508, %v310
        %v517 = vsub.f32 %v509, %v315
        %v518 = vsub.f32 %v510, %v320
        %v519 = vmax.f32 %v511, 0.0
        %v520 = vmax.f32 %v512, 0.0
        %v521 = vmax.f32 %v513, 0.0
        %v522 = vmax.f32 %v514, 0.0
        %v523 = vmax.f32 %v515, 0.0
        %v524 = vmax.f32 %v516, 0.0
        %v525 = vmax.f32 %v517, 0.0
        %v526 = vmax.f32 %v518, 0.0
        %v527 = vrsqrt.pop %v519
        %v528 = vmul.f32 %v519, %v527
        %vm529 = vcmp.eq.f32.partialorder %v519, inf
        %v530 = vsel %vm529, %v519, %v528
        %vm531 = vcmp.eq.f32.partialorder %v519, 0.0
        %v532 = vand.u32 %v519, 2147483648
        %v533 = vsel %vm531, %v532, %v530
        %v534 = vrsqrt.pop %v520
        %v535 = vmul.f32 %v520, %v534
        %vm536 = vcmp.eq.f32.partialorder %v520, inf
        %v537 = vsel %vm536, %v520, %v535
        %vm538 = vcmp.eq.f32.partialorder %v520, 0.0
        %v539 = vand.u32 %v520, 2147483648
        %v540 = vsel %vm538, %v539, %v537
        %v541 = vrsqrt.pop %v521
        %v542 = vmul.f32 %v521, %v541
        %vm543 = vcmp.eq.f32.partialorder %v521, inf
        %v544 = vsel %vm543, %v521, %v542
        %vm545 = vcmp.eq.f32.partialorder %v521, 0.0
        %v546 = vand.u32 %v521, 2147483648
        %v547 = vsel %vm545, %v546, %v544
        %v548 = vrsqrt.pop %v522
        %v549 = vmul.f32 %v522, %v548
        %vm550 = vcmp.eq.f32.partialorder %v522, inf
        %v551 = vsel %vm550, %v522, %v549
        %vm552 = vcmp.eq.f32.partialorder %v522, 0.0
        %v553 = vand.u32 %v522, 2147483648
        %v554 = vsel %vm552, %v553, %v551
        %v555 = vrsqrt.pop %v523
        %v556 = vmul.f32 %v523, %v555
        %vm557 = vcmp.eq.f32.partialorder %v523, inf
        %v558 = vsel %vm557, %v523, %v556
        %vm559 = vcmp.eq.f32.partialorder %v523, 0.0
        %v560 = vand.u32 %v523, 2147483648
        %v561 = vsel %vm559, %v560, %v558
        %v562 = vrsqrt.pop %v524
        %v563 = vmul.f32 %v524, %v562
        %vm564 = vcmp.eq.f32.partialorder %v524, inf
        %v565 = vsel %vm564, %v524, %v563
        %vm566 = vcmp.eq.f32.partialorder %v524, 0.0
        %v567 = vand.u32 %v524, 2147483648
        %v568 = vsel %vm566, %v567, %v565
        %v569 = vrsqrt.pop %v525
        %v570 = vmul.f32 %v525, %v569
        %vm571 = vcmp.eq.f32.partialorder %v525, inf
        %v572 = vsel %vm571, %v525, %v570
        %vm573 = vcmp.eq.f32.partialorder %v525, 0.0
        %v574 = vand.u32 %v525, 2147483648
        %v575 = vsel %vm573, %v574, %v572
        %v576 = vrsqrt.pop %v526
        %v577 = vmul.f32 %v526, %v576
        %vm578 = vcmp.eq.f32.partialorder %v526, inf
        %v579 = vsel %vm578, %v526, %v577
        %vm580 = vcmp.eq.f32.partialorder %v526, 0.0
        %v581 = vand.u32 %v526, 2147483648
        %v582 = vsel %vm580, %v581, %v579
        %v583 = vsub.f32 0.0, %v533
        %v584 = vsub.f32 0.0, %v540
        %v585 = vsub.f32 0.0, %v547
        %v586 = vsub.f32 0.0, %v554
        %v587 = vsub.f32 0.0, %v561
        %v588 = vsub.f32 0.0, %v568
        %v589 = vsub.f32 0.0, %v575
        %v590 = vsub.f32 0.0, %v582
        %vm591 = vcmask 523264
        %v592 = vsel %vm591, %v583, -inf
        %593 = vmax.xlane.f32.xlu0 %v592
        %v594 = vpop.xlane.xlu0 %593
        %v595 = vsel %vm591, %v584, -inf
        %596 = vmax.xlane.f32.xlu0 %v595
        %v597 = vpop.xlane.xlu0 %596
        %v598 = vsel %vm591, %v585, -inf
        %599 = vmax.xlane.f32.xlu0 %v598
        %v600 = vpop.xlane.xlu0 %599
        %v601 = vsel %vm591, %v586, -inf
        %602 = vmax.xlane.f32.xlu0 %v601
        %v603 = vpop.xlane.xlu0 %602
        %v604 = vsel %vm591, %v587, -inf
        %605 = vmax.xlane.f32.xlu0 %v604
        %v606 = vpop.xlane.xlu0 %605
        %v607 = vsel %vm591, %v588, -inf
        %608 = vmax.xlane.f32.xlu0 %v607
        %v609 = vpop.xlane.xlu0 %608
        %v610 = vsel %vm591, %v589, -inf
        %611 = vmax.xlane.f32.xlu0 %v610
        %v612 = vpop.xlane.xlu0 %611
        %v613 = vsel %vm591, %v590, -inf
        %614 = vmax.xlane.f32.xlu0 %v613
        %v615 = vpop.xlane.xlu0 %614
        %v616 = vsub.f32 %v583, %v594
        %v617 = vsub.f32 %v584, %v597
        %v618 = vsub.f32 %v585, %v600
        %v619 = vsub.f32 %v586, %v603
        %v620 = vsub.f32 %v587, %v606
        %v621 = vsub.f32 %v588, %v609
        %v622 = vsub.f32 %v589, %v612
        %v623 = vsub.f32 %v590, %v615
        %v624 = vmul.f32 %v616, 1.442695
        %v625 = vpow.pop %v624
        %v626 = vmul.f32 %v617, 1.442695
        %v627 = vpow.pop %v626
        %v628 = vmul.f32 %v618, 1.442695
        %v629 = vpow.pop %v628
        %v630 = vmul.f32 %v619, 1.442695
        %v631 = vpow.pop %v630
        %v632 = vmul.f32 %v620, 1.442695
        %v633 = vpow.pop %v632
        %v634 = vmul.f32 %v621, 1.442695
        %v635 = vpow.pop %v634
        %v636 = vmul.f32 %v622, 1.442695
        %v637 = vpow.pop %v636
        %v638 = vmul.f32 %v623, 1.442695
        %v639 = vpow.pop %v638
        %v640 = vsel %vm591, %v625, 0.0
        %641 = vadd.xlane.f32.xlu0 %v640
        %v642 = vpop.xlane.xlu0 %641
        %v643 = vsel %vm591, %v627, 0.0
        %644 = vadd.xlane.f32.xlu0 %v643
        %v645 = vpop.xlane.xlu0 %644
        %v646 = vsel %vm591, %v629, 0.0
        %647 = vadd.xlane.f32.xlu0 %v646
        %v648 = vpop.xlane.xlu0 %647
        %v649 = vsel %vm591, %v631, 0.0
        %650 = vadd.xlane.f32.xlu0 %v649
        %v651 = vpop.xlane.xlu0 %650
        %v652 = vsel %vm591, %v633, 0.0
        %653 = vadd.xlane.f32.xlu0 %v652
        %v654 = vpop.xlane.xlu0 %653
        %v655 = vsel %vm591, %v635, 0.0
        %656 = vadd.xlane.f32.xlu0 %v655
        %v657 = vpop.xlane.xlu0 %656
        %v658 = vsel %vm591, %v637, 0.0
        %659 = vadd.xlane.f32.xlu0 %v658
        %v660 = vpop.xlane.xlu0 %659
        %v661 = vsel %vm591, %v639, 0.0
        %662 = vadd.xlane.f32.xlu0 %v661
        %v663 = vpop.xlane.xlu0 %662
        %664 = vrot.lane.b32.xlu0 %v137, 64
        %v665 = vpop.permute.xlu0 %664
        %666 = vrot.lane.b32.xlu0 %v138, 64
        %v667 = vpop.permute.xlu0 %666
        %668 = vrot.lane.b32.xlu0 %v139, 64
        %v669 = vpop.permute.xlu0 %668
        %670 = vrot.lane.b32.xlu0 %v140, 64
        %v671 = vpop.permute.xlu0 %670
        %672 = vrot.lane.b32.xlu0 %v141, 64
        %v673 = vpop.permute.xlu0 %672
        %674 = vrot.lane.b32.xlu0 %v142, 64
        %v675 = vpop.permute.xlu0 %674
        %676 = vrot.lane.b32.xlu0 %v143, 64
        %v677 = vpop.permute.xlu0 %676
        %678 = vrot.lane.b32.xlu0 %v144, 64
        %v679 = vpop.permute.xlu0 %678
        %v689 = vsel %vm591, %v625, 0
        %v692 = vsel %vm591, %v627, 0
        %v695 = vsel %vm591, %v629, 0
        %v698 = vsel %vm591, %v631, 0
        %v701 = vsel %vm591, %v633, 0
        %v704 = vsel %vm591, %v635, 0
        %v707 = vsel %vm591, %v637, 0
        %v710 = vsel %vm591, %v639, 0
        %712 = vmatprep.subr.mxu0 0.0
        %713 = vmatpush1.msra.mxu0 %v665
        %714 = vmatprep.subr.mxu0 0.0
        %715 = vmatpush1.msra.mxu0 %v667
        %716 = vmatprep.subr.mxu0 0.0
        %717 = vmatpush1.msra.mxu0 %v669
        %718 = vmatprep.subr.mxu0 0.0
        %719 = vmatpush1.msra.mxu0 %v671
        %720 = vmatprep.subr.mxu0 0.0
        %721 = vmatpush1.msra.mxu0 %v673
        %722 = vmatprep.subr.mxu0 0.0
        %723 = vmatpush1.msra.mxu0 %v675
        %724 = vmatprep.subr.mxu0 0.0
        %725 = vmatpush1.msra.mxu0 %v677
        %726 = vmatprep.subr.mxu0 0.0
        %727 = vmatpush1.msra.mxu0 %v679
        %728 = vmatprep.subr.mxu0 0.0
        %729 = vmatpush1.msra.mxu0 0.0
        %730 = vmatprep.subr.mxu0 0.0
        %731 = vmatpush1.msra.mxu0 0.0
        %732 = vmatprep.subr.mxu0 0.0
        %733 = vmatpush1.msra.mxu0 0.0
        %734 = vmatprep.subr.mxu0 0.0
        %735 = vmatpush1.msra.mxu0 0.0
        %736 = vmatprep.subr.mxu0 0.0
        %737 = vmatpush1.msra.mxu0 0.0
        %738 = vmatprep.subr.mxu0 0.0
        %739 = vmatpush1.msra.mxu0 0.0
        %740 = vmatprep.subr.mxu0 0.0
        %741 = vmatpush1.msra.mxu0 0.0
        %742 = vmatprep.subr.mxu0 0.0
        %743 = vmatpush1.msra.mxu0 0.0
        %744 = vmatprep.subr.mxu0 0.0
        %745 = vmatpush1.msra.mxu0 0.0
        %746 = vmatprep.subr.mxu0 0.0
        %747 = vmatpush1.msra.mxu0 0.0
        %748 = vmatprep.subr.mxu0 0.0
        %749 = vmatpush1.msra.mxu0 0.0
        %750 = vmatprep.subr.mxu0 0.0
        %751 = vmatpush1.msra.mxu0 0.0
        %752 = vmatprep.subr.mxu0 0.0
        %753 = vmatpush1.msra.mxu0 0.0
        %754 = vmatprep.subr.mxu0 0.0
        %755 = vmatpush1.msra.mxu0 0.0
        %756 = vmatprep.subr.mxu0 0.0
        %757 = vmatpush1.msra.mxu0 0.0
        %758 = vmatprep.subr.mxu0 0.0
        %759 = vmatpush1.msra.mxu0 0.0
        %760 = vmatprep.subr.mxu0 0.0
        %761 = vmatpush1.msra.mxu0 0.0
        %762 = vmatprep.subr.mxu0 0.0
        %763 = vmatpush1.msra.mxu0 0.0
        %764 = vmatprep.subr.mxu0 0.0
        %765 = vmatpush1.msra.mxu0 0.0
        %766 = vmatprep.subr.mxu0 0.0
        %767 = vmatpush1.msra.mxu0 0.0
        %768 = vmatprep.subr.mxu0 0.0
        %769 = vmatpush1.msra.mxu0 0.0
        %770 = vmatprep.subr.mxu0 0.0
        %771 = vmatpush1.msra.mxu0 0.0
        %772 = vmatprep.subr.mxu0 0.0
        %773 = vmatpush1.msra.mxu0 0.0
        %774 = vmatprep.subr.mxu0 0.0
        %775 = vmatpush1.msra.mxu0 0.0
        %776 = vmatprep.mubr.f32.mxu0 0.0
        %777 = vmatmul.mubr.f32.gmra.mrb[0].mxu0 %v689
        %v778 = vpop.f32.mrb[0].mxu0
        %v779 = vadd.f32 0.0, %v778
        %v780 = vpop.f32.mrb[0].mxu0
        %781 = vmatprep.mubr.f32.mxu0 0.0
        %782 = vmatmul.mubr.f32.gmra.mrb[0].mxu0 %v692
        %v783 = vpop.f32.mrb[0].mxu0
        %v784 = vadd.f32 0.0, %v783
        %v785 = vpop.f32.mrb[0].mxu0
        %786 = vmatprep.mubr.f32.mxu0 0.0
        %787 = vmatmul.mubr.f32.gmra.mrb[0].mxu0 %v695
        %v788 = vpop.f32.mrb[0].mxu0
        %v789 = vadd.f32 0.0, %v788
        %v790 = vpop.f32.mrb[0].mxu0
        %791 = vmatprep.mubr.f32.mxu0 0.0
        %792 = vmatmul.mubr.f32.gmra.mrb[0].mxu0 %v698
        %v793 = vpop.f32.mrb[0].mxu0
        %v794 = vadd.f32 0.0, %v793
        %v795 = vpop.f32.mrb[0].mxu0
        %796 = vmatprep.mubr.f32.mxu0 0.0
        %797 = vmatmul.mubr.f32.gmra.mrb[0].mxu0 %v701
        %v798 = vpop.f32.mrb[0].mxu0
        %v799 = vadd.f32 0.0, %v798
        %v800 = vpop.f32.mrb[0].mxu0
        %801 = vmatprep.mubr.f32.mxu0 0.0
        %802 = vmatmul.mubr.f32.gmra.mrb[0].mxu0 %v704
        %v803 = vpop.f32.mrb[0].mxu0
        %v804 = vadd.f32 0.0, %v803
        %v805 = vpop.f32.mrb[0].mxu0
        %806 = vmatprep.mubr.f32.mxu0 0.0
        %807 = vmatmul.mubr.f32.gmra.mrb[0].mxu0 %v707
        %v808 = vpop.f32.mrb[0].mxu0
        %v809 = vadd.f32 0.0, %v808
        %v810 = vpop.f32.mrb[0].mxu0
        %811 = vmatprep.mubr.f32.mxu0 0.0
        %812 = vmatmul.mubr.f32.gmra.mrb[0].mxu0 %v710
        %v813 = vpop.f32.mrb[0].mxu0
        %v814 = vadd.f32 0.0, %v813
        %v815 = vpop.f32.mrb[0].mxu0
        %816 = vdwg.mxu0
        %v817 = vrcp.pop %v642
        %v818 = vrcp.pop %v645
        %v819 = vrcp.pop %v648
        %v820 = vrcp.pop %v651
        %v821 = vrcp.pop %v654
        %v822 = vrcp.pop %v657
        %v823 = vrcp.pop %v660
        %v824 = vrcp.pop %v663
        %v825 = vmul.f32 %v779, %v817
        %v826 = vmul.f32 %v784, %v818
        %v827 = vmul.f32 %v789, %v819
        %v828 = vmul.f32 %v794, %v820
        %v829 = vmul.f32 %v799, %v821
        %v830 = vmul.f32 %v804, %v822
        %v831 = vmul.f32 %v809, %v823
        %v832 = vmul.f32 %v814, %v824
        %833 = vst.msk [vmem:[%s136] sm:$0xff] %vm177, %v825
        %834 = vst.msk [vmem:[%s136 + $0x8] sm:$0xff] %vm177, %v826
        %835 = vst.msk [vmem:[%s136 + $0x10] sm:$0xff] %vm177, %v827
        %836 = vst.msk [vmem:[%s136 + $0x18] sm:$0xff] %vm177, %v828
        %837 = vst.msk [vmem:[%s136 + $0x20] sm:$0xff] %vm177, %v829
        %838 = vst.msk [vmem:[%s136 + $0x28] sm:$0xff] %vm177, %v830
        %839 = vst.msk [vmem:[%s136 + $0x30] sm:$0xff] %vm177, %v831
        %840 = vst.msk [vmem:[%s136 + $0x38] sm:$0xff] %vm177, %v832
        %p841 = scmp.lt.s32.totalorder %s15, 1
        %s842 = scalar_select %p841, %s15, 1
        %s843 = smul.addr %s842, 8
        %s844 = smul.addr %s843, 8
        %s845 = scalar_lea.vmem %s1, %s844
        // Predicated region
        $region29: #{tpu_custom_call.1} parent=23 // pred_check
          %p846 = pneg %p59
        $region30: #{tpu_custom_call.1} parent=23 // pred_check_branch
          %848 = sbr.rel (%p846) target = $region32
        $region31: #{tpu_custom_call.1} parent=23 // pred_region
          _
        $region32: #{tpu_custom_call.1} parent=23 // pred_fallthru
          _
      $region24: #{tpu_custom_call.1} parent=5 // pred_fallthru
        _
      %p849 = scmp.le.s32.totalorder 2, %s10
      // Predicated region
      $region33: #{tpu_custom_call.1} parent=5 // pred_check
        %p850 = pneg %p849
      $region34: #{tpu_custom_call.1} parent=5 // pred_check_branch
        %852 = sbr.rel (%p850) target = $region36
      $region35: #{tpu_custom_call.1} parent=5 // pred_region
        %s853 = ssub.s32 %s10, 2
        // Predicated region
        $region37: #{tpu_custom_call.1} parent=35 // pred_check
          %p854 = pneg %p65
        $region38: #{tpu_custom_call.1} parent=35 // pred_check_branch
          %856 = sbr.rel (%p854) target = $region40
        $region39: #{tpu_custom_call.1} parent=35 // pred_region
          %p857 = scmp.lt.s32.totalorder %s16, 1
          %s858 = scalar_select %p857, %s16, 1
          %s859 = smul.addr %s858, 8
          %s860 = smul.addr %s859, 8
          %s861 = scalar_lea.vmem %s1, %s860
        $region40: #{tpu_custom_call.1} parent=35 // pred_fallthru
          _
      $region36: #{tpu_custom_call.1} parent=5 // pred_fallthru
        _
    $region6: #{tpu_custom_call.1} parent=1 // loop_footer
      %s14 = sadd.s32 1, %s10
    $region7: #{tpu_custom_call.1} parent=1 // loop_footer_branch
      %9 = sbr.rel target = $region3
    $region8: #{tpu_custom_call.1} parent=1 // loop_exit
      _
    %862 = vsyncpa [#allocation3], 1
    %s863 = scalar_lea.sflag [#allocation3], 1
    %864 = vsyncpa %s863, 1

</llo_original>
